<compile_context>
chip_gen: v5e
topology: v5e:2x2
jax: 0.10.0
libtpu: 0.0.40
codegen_flags: <defaults>
</compile_context>

<pallas_src>
import jax
import jax.numpy as jnp
from jax import lax
from jax.experimental import pallas as pl
from jax.experimental.pallas import tpu as pltpu

NEG_SLOPE = 0.01  # torch.nn.functional.leaky_relu default negative_slope


def _leaky_relu(v):
    return jnp.where(v > 0, v, NEG_SLOPE * v)


def _dot(a, b):
    # a @ b with f32 accumulation on the MXU
    return lax.dot_general(a, b, (((1,), (0,)), ((), ())),
                           preferred_element_type=jnp.float32)


def _dot_t(a, b):
    # a^T @ b (contract dim 0 of both) -> MXU transposed contraction,
    # no in-kernel XLU transpose of the big operand.
    return lax.dot_general(a, b, (((0,), (0,)), ((), ())),
                           preferred_element_type=jnp.float32)


def sgat_kernel(x_ref, ei_ref, w_ref, b_ref, aboth_ref, sel_ref, red_ref,
                feat_ref, score_ref):
    e_pad = ei_ref.shape[0]
    n_pad = x_ref.shape[0]
    sc = w_ref.shape[1]                    # size * out_channel
    size = aboth_ref.shape[1] // 2

    f32 = jnp.float32

    # ---- build incidence one-hots in-kernel from edge_index (no HBM traffic)
    ei = ei_ref[...]                                          # [E, 2] int32
    col = lax.broadcasted_iota(jnp.int32, (e_pad, n_pad), 1)  # node-id per lane
    src_oh = (col == ei[:, 0:1]).astype(f32)                  # [E, N]
    dst_oh = (col == ei[:, 1:2]).astype(f32)                  # [E, N]
    # padded edges carry sentinel id n_pad -> all-zero rows -> contribute nothing

    # ---- fused per-conv linear transform: h_all[:, i*Co:(i+1)*Co] = x@W_i + b_i
    h_all = _dot(x_ref[...], w_ref[...]) + b_ref[...]         # [N, SC]

    # ---- per-node src/dst attention projections for all convs, one pass
    n_att = _dot(h_all, aboth_ref[...])                       # [N, 2*size]

    # ---- single src-gather pass producing h_src AND e_src_att together
    src_rhs = jnp.concatenate([h_all, n_att[:, :size]], axis=1)   # [N, SC+size]
    src_cat = _dot(src_oh, src_rhs)                           # [E, SC+size]
    h_src = src_cat[:, :sc]                                   # [E, SC]
    e_src_att = src_cat[:, sc:]                               # [E, size]

    # ---- dst-gather of the per-node dst attention
    e_dst_att = _dot(dst_oh, n_att[:, size:])                 # [E, size]
    attn = _leaky_relu(e_src_att + e_dst_att)                 # [E, size]

    # ---- attention-weighted messages; scatter-mean onto dst nodes with the
    #      in-degree fused in as one extra ones lane (single A^T.B pass)
    msg = _dot(attn, sel_ref[...]) * h_src                    # [E, SC]
    ones_e = jnp.ones((e_pad, 1), f32)
    agg_deg = _dot_t(dst_oh, jnp.concatenate([msg, ones_e], axis=1))  # [N, SC+1]
    agg = agg_deg[:, :sc]
    deg_in = agg_deg[:, sc:]                                  # [N, 1]
    feature = h_all + agg / jnp.maximum(deg_in, 1.0)          # exact divide

    # feature_list: sum_i leaky_relu(feature_i) -> [N, Cout]
    feat_ref[...] = _dot(_leaky_relu(feature), red_ref[...])

    # ---- g_pooling: scatter-mean of summed edge attention onto src nodes,
    #      out-degree fused as a second row of the same MXU pass, [2, N]
    attn_sum = jnp.sum(attn, axis=1, keepdims=True)           # [E, 1]
    ns_deg = _dot_t(jnp.concatenate([attn_sum, ones_e], axis=1), src_oh)  # [2, N]
    score_ref[...] = ns_deg[0:1, :] / jnp.maximum(ns_deg[1:2, :], 1.0)


def sgat_forward(x, edge_index, params, direction=1.0):
    size, in_channel, out_channel = params["weight"].shape
    n = x.shape[0]
    e = edge_index.shape[1]
    sc = size * out_channel

    # ---- wrapper: layout plumbing only ------------------------------------
    n_pad = max(128, ((n + 127) // 128) * 128)   # lane-dense [E,N] / [1,N]
    e_pad = ((e + 7) // 8) * 8                   # sublane-aligned edge dim

    x_p = jnp.zeros((n_pad, in_channel), jnp.float32).at[:n].set(
        x.astype(jnp.float32))
    # edge_index as [E_pad, 2]; padded edges get sentinel id n_pad (matches no node)
    ei_t = jnp.full((e_pad, 2), n_pad, dtype=jnp.int32)
    ei_t = ei_t.at[:e, 0].set(edge_index[0].astype(jnp.int32))
    ei_t = ei_t.at[:e, 1].set(edge_index[1].astype(jnp.int32))

    # Fuse per-conv parameters into single wide operands.
    w_all = jnp.transpose(params["weight"], (1, 0, 2)).reshape(in_channel, sc)
    b_all = params["bias"].reshape(1, sc)
    eye_s = jnp.eye(size, dtype=jnp.float32)
    att = params["att"]
    # block-diagonal per-conv attention vectors, concatenated: [SC, 2*size]
    a_src = (att[:, :out_channel][:, :, None] * eye_s[:, None, :]).reshape(sc, size)
    a_dst = (att[:, out_channel:][:, :, None] * eye_s[:, None, :]).reshape(sc, size)
    a_both = jnp.concatenate([a_src, a_dst], axis=1)                     # [SC, 2*size]
    sel = jnp.kron(eye_s, jnp.ones((1, out_channel), jnp.float32))       # [size, SC]
    red = jnp.tile(jnp.eye(out_channel, dtype=jnp.float32), (size, 1))   # [SC, Cout]

    flops = 2 * (n_pad * in_channel * sc            # h_all
                 + n_pad * sc * 2 * size            # n_att
                 + e_pad * n_pad * (sc + size)      # src gather
                 + e_pad * n_pad * size             # dst gather
                 + e_pad * size * sc                # attn expand
                 + e_pad * n_pad * (sc + 1)         # dst scatter + deg
                 + n_pad * sc * out_channel         # conv-sum
                 + e_pad * n_pad * 2)               # score scatter + deg
    bytes_accessed = 4 * (n_pad * in_channel + in_channel * sc + sc
                          + sc * 2 * size + size * sc + sc * out_channel
                          + n_pad * out_channel + n_pad + e_pad * 2)

    vmem = pl.BlockSpec(memory_space=pltpu.MemorySpace.VMEM)
    feat_p, scores_row = pl.pallas_call(
        sgat_kernel,
        out_shape=(jax.ShapeDtypeStruct((n_pad, out_channel), jnp.float32),
                   jax.ShapeDtypeStruct((1, n_pad), jnp.float32)),
        in_specs=[vmem] * 7,
        out_specs=(vmem, vmem),
        compiler_params=pltpu.CompilerParams(vmem_limit_bytes=16 * 1024 * 1024),
        cost_estimate=pl.CostEstimate(flops=int(flops), transcendentals=0,
                                      bytes_accessed=int(bytes_accessed)),
    )(x_p, ei_t, w_all, b_all, a_both, sel, red)

    feat = feat_p[:n]
    node_scores = direction * scores_row[0, :n]     # .view(-1), direction folded here
    return feat, node_scores


def sgat_reference(x, edge_index, params, direction=1.0):
    """Pure-JAX reference with the same SAGEAttn closed form (for parity check)."""
    size, cin, cout = params["weight"].shape
    n = x.shape[0]
    src, dst = edge_index[0], edge_index[1]
    deg_in = jnp.zeros((n,), jnp.float32).at[dst].add(1.0)
    deg_out = jnp.zeros((n,), jnp.float32).at[src].add(1.0)
    hp = lax.Precision.HIGHEST
    feat_sum = None
    attn_cols = []
    for i in range(size):
        h = jnp.dot(x, params["weight"][i], precision=hp) + params["bias"][i]
        a_s = params["att"][i, :cout]
        a_d = params["att"][i, cout:]
        logits = (jnp.dot(h[src], a_s, precision=hp)
                  + jnp.dot(h[dst], a_d, precision=hp))
        alpha = jnp.where(logits > 0, logits, NEG_SLOPE * logits)
        msg = alpha[:, None] * h[src]
        agg = jnp.zeros((n, cout), jnp.float32).at[dst].add(msg)
        feature = h + agg / jnp.maximum(deg_in, 1.0)[:, None]
        fl = jnp.where(feature > 0, feature, NEG_SLOPE * feature)
        feat_sum = fl if feat_sum is None else feat_sum + fl
        attn_cols.append(alpha)
    attn_sum = jnp.sum(jnp.stack(attn_cols, axis=1), axis=1)
    ns = jnp.zeros((n,), jnp.float32).at[src].add(attn_sum)
    node_scores = direction * ns / jnp.maximum(deg_out, 1.0)
    return feat_sum, node_scores


def init_params(key, size, in_channel, out_channel):
    # deterministic glorot-uniform init (shapes match SAGEAttn per conv, stacked)
    kw, ka = jax.random.split(key)
    lim_w = (6.0 / (in_channel + out_channel)) ** 0.5
    weight = jax.random.uniform(kw, (size, in_channel, out_channel),
                                jnp.float32, -lim_w, lim_w)
    lim_a = (6.0 / (2 * out_channel + 1)) ** 0.5
    att = jax.random.uniform(ka, (size, 2 * out_channel), jnp.float32,
                             -lim_a, lim_a)
    bias = jnp.zeros((size, out_channel), jnp.float32)
    return {"weight": weight, "bias": bias, "att": att}


if __name__ == "__main__":
    key = jax.random.PRNGKey(0)
    N, E = 16, 32
    size, in_channel, out_channel = 3, 8, 16   # SGAT(size=3, in=8, out=16)

    kx, kp = jax.random.split(key)
    x = jax.random.normal(kx, (N, in_channel), jnp.float32)

    # small deterministic graph: each node i has edges i->(i+1)%N and i->(i+2)%N
    src = jnp.arange(E, dtype=jnp.int32) % N
    dst = jnp.concatenate([(jnp.arange(N, dtype=jnp.int32) + 1) % N,
                           (jnp.arange(N, dtype=jnp.int32) + 2) % N])
    edge_index = jnp.stack([src, dst], axis=0)

    params = init_params(kp, size, in_channel, out_channel)

    feat, node_scores = sgat_forward(x, edge_index, params, direction=1.0)
    jax.block_until_ready((feat, node_scores))

    assert feat.shape == (N, out_channel)
    assert node_scores.shape == (N,)
    assert jnp.all(jnp.isfinite(feat)) and jnp.all(jnp.isfinite(node_scores))

    # parity against a pure-JAX reference of the same closed form
    feat_ref, score_ref = sgat_reference(x, edge_index, params, direction=1.0)
    assert jnp.allclose(feat, feat_ref, rtol=1e-3, atol=1e-3)
    assert jnp.allclose(node_scores, score_ref, rtol=1e-3, atol=1e-3)

    print("KERNEL_OK")
</pallas_src>

<mosaic_0001>
module attributes {stable_mosaic.version = 11 : i64} {
  func.func @sgat_kernel(%arg0: memref<128x8xf32, #tpu.memory_space<vmem>>, %arg1: memref<32x2xi32, #tpu.memory_space<vmem>>, %arg2: memref<8x48xf32, #tpu.memory_space<vmem>>, %arg3: memref<1x48xf32, #tpu.memory_space<vmem>>, %arg4: memref<48x6xf32, #tpu.memory_space<vmem>>, %arg5: memref<3x48xf32, #tpu.memory_space<vmem>>, %arg6: memref<48x16xf32, #tpu.memory_space<vmem>>, %arg7: memref<128x16xf32, #tpu.memory_space<vmem>>, %arg8: memref<1x128xf32, #tpu.memory_space<vmem>>) attributes {dimension_semantics = [], scalar_prefetch = 0 : i64, scratch_operands = 0 : i64, tpu.core_type = #tpu.core_type<tc>} {
    %c0 = arith.constant 0 : index
    %c0_0 = arith.constant 0 : index
    %0 = vector.load %arg1[%c0, %c0_0] : memref<32x2xi32, #tpu.memory_space<vmem>>, vector<32x2xi32>
    %1 = tpu.iota {dimensions = array<i32: 1>} : vector<32x128xi32>
    %2 = vector.extract_strided_slice %0 {offsets = [0, 0], sizes = [32, 1], strides = [1, 1]} : vector<32x2xi32> to vector<32x1xi32>
    %3 = vector.broadcast %2 : vector<32x1xi32> to vector<32x128xi32>
    %4 = arith.cmpi eq, %1, %3 : vector<32x128xi32>
    %5 = arith.extui %4 : vector<32x128xi1> to vector<32x128xi32>
    %6 = arith.sitofp %5 : vector<32x128xi32> to vector<32x128xf32>
    %7 = vector.extract_strided_slice %0 {offsets = [0, 1], sizes = [32, 1], strides = [1, 1]} : vector<32x2xi32> to vector<32x1xi32>
    %8 = vector.broadcast %7 : vector<32x1xi32> to vector<32x128xi32>
    %9 = arith.cmpi eq, %1, %8 : vector<32x128xi32>
    %10 = arith.extui %9 : vector<32x128xi1> to vector<32x128xi32>
    %11 = arith.sitofp %10 : vector<32x128xi32> to vector<32x128xf32>
    %c0_1 = arith.constant 0 : index
    %c0_2 = arith.constant 0 : index
    %12 = vector.load %arg0[%c0_1, %c0_2] : memref<128x8xf32, #tpu.memory_space<vmem>>, vector<128x8xf32>
    %c0_3 = arith.constant 0 : index
    %c0_4 = arith.constant 0 : index
    %13 = vector.load %arg2[%c0_3, %c0_4] : memref<8x48xf32, #tpu.memory_space<vmem>>, vector<8x48xf32>
    %cst = arith.constant dense<0.000000e+00> : vector<128x48xf32>
    %14 = tpu.matmul %12, %13, %cst {dimension_numbers = #tpu.dot_dimension_numbers<[1], [0], [0], [1], [0, 0, 1, 1], [], []>} : vector<128x8xf32>, vector<8x48xf32>, vector<128x48xf32> -> vector<128x48xf32>
    %c0_5 = arith.constant 0 : index
    %c0_6 = arith.constant 0 : index
    %15 = vector.load %arg3[%c0_5, %c0_6] : memref<1x48xf32, #tpu.memory_space<vmem>>, vector<1x48xf32>
    %16 = vector.broadcast %15 : vector<1x48xf32> to vector<128x48xf32>
    %17 = arith.addf %14, %16 : vector<128x48xf32>
    %c0_7 = arith.constant 0 : index
    %c0_8 = arith.constant 0 : index
    %18 = vector.load %arg4[%c0_7, %c0_8] : memref<48x6xf32, #tpu.memory_space<vmem>>, vector<48x6xf32>
    %cst_9 = arith.constant dense<0.000000e+00> : vector<128x6xf32>
    %19 = tpu.matmul %17, %18, %cst_9 {dimension_numbers = #tpu.dot_dimension_numbers<[1], [0], [0], [1], [0, 0, 1, 1], [], []>} : vector<128x48xf32>, vector<48x6xf32>, vector<128x6xf32> -> vector<128x6xf32>
    %20 = vector.extract_strided_slice %19 {offsets = [0, 0], sizes = [128, 3], strides = [1, 1]} : vector<128x6xf32> to vector<128x3xf32>
    %21 = tpu.concatenate %17, %20 in 1 : vector<128x48xf32>, vector<128x3xf32> -> vector<128x51xf32>
    %cst_10 = arith.constant dense<0.000000e+00> : vector<32x51xf32>
    %22 = tpu.matmul %6, %21, %cst_10 {dimension_numbers = #tpu.dot_dimension_numbers<[1], [0], [0], [1], [0, 0, 1, 1], [], []>} : vector<32x128xf32>, vector<128x51xf32>, vector<32x51xf32> -> vector<32x51xf32>
    %23 = vector.extract_strided_slice %22 {offsets = [0, 0], sizes = [32, 48], strides = [1, 1]} : vector<32x51xf32> to vector<32x48xf32>
    %24 = vector.extract_strided_slice %22 {offsets = [0, 48], sizes = [32, 3], strides = [1, 1]} : vector<32x51xf32> to vector<32x3xf32>
    %25 = vector.extract_strided_slice %19 {offsets = [0, 3], sizes = [128, 3], strides = [1, 1]} : vector<128x6xf32> to vector<128x3xf32>
    %cst_11 = arith.constant dense<0.000000e+00> : vector<32x3xf32>
    %26 = tpu.matmul %11, %25, %cst_11 {dimension_numbers = #tpu.dot_dimension_numbers<[1], [0], [0], [1], [0, 0, 1, 1], [], []>} : vector<32x128xf32>, vector<128x3xf32>, vector<32x3xf32> -> vector<32x3xf32>
    %27 = arith.addf %24, %26 : vector<32x3xf32>
    %cst_12 = arith.constant 0.000000e+00 : f32
    %28 = vector.broadcast %cst_12 : f32 to vector<32x3xf32>
    %29 = arith.cmpf ogt, %27, %28 : vector<32x3xf32>
    %cst_13 = arith.constant 0.00999999977 : f32
    %30 = vector.broadcast %cst_13 : f32 to vector<32x3xf32>
    %31 = arith.mulf %30, %27 : vector<32x3xf32>
    %32 = arith.select %29, %27, %31 : vector<32x3xi1>, vector<32x3xf32>
    %c0_14 = arith.constant 0 : index
    %c0_15 = arith.constant 0 : index
    %33 = vector.load %arg5[%c0_14, %c0_15] : memref<3x48xf32, #tpu.memory_space<vmem>>, vector<3x48xf32>
    %cst_16 = arith.constant dense<0.000000e+00> : vector<32x48xf32>
    %34 = tpu.matmul %32, %33, %cst_16 {dimension_numbers = #tpu.dot_dimension_numbers<[1], [0], [0], [1], [0, 0, 1, 1], [], []>} : vector<32x3xf32>, vector<3x48xf32>, vector<32x48xf32> -> vector<32x48xf32>
    %35 = arith.mulf %34, %23 : vector<32x48xf32>
    %cst_17 = arith.constant 1.000000e+00 : f32
    %36 = vector.broadcast %cst_17 : f32 to vector<32x1xf32>
    %37 = tpu.concatenate %35, %36 in 1 : vector<32x48xf32>, vector<32x1xf32> -> vector<32x49xf32>
    %cst_18 = arith.constant dense<0.000000e+00> : vector<128x49xf32>
    %38 = tpu.matmul %11, %37, %cst_18 {dimension_numbers = #tpu.dot_dimension_numbers<[0], [0], [1], [1], [0, 1, 1, 1], [], []>} : vector<32x128xf32>, vector<32x49xf32>, vector<128x49xf32> -> vector<128x49xf32>
    %39 = vector.extract_strided_slice %38 {offsets = [0, 0], sizes = [128, 48], strides = [1, 1]} : vector<128x49xf32> to vector<128x48xf32>
    %40 = vector.extract_strided_slice %38 {offsets = [0, 48], sizes = [128, 1], strides = [1, 1]} : vector<128x49xf32> to vector<128x1xf32>
    %cst_19 = arith.constant 1.000000e+00 : f32
    %41 = vector.broadcast %cst_19 : f32 to vector<128x1xf32>
    %42 = arith.maximumf %40, %41 : vector<128x1xf32>
    %43 = vector.broadcast %42 : vector<128x1xf32> to vector<128x48xf32>
    %44 = arith.divf %39, %43 : vector<128x48xf32>
    %45 = arith.addf %17, %44 : vector<128x48xf32>
    %cst_20 = arith.constant 0.000000e+00 : f32
    %46 = vector.broadcast %cst_20 : f32 to vector<128x48xf32>
    %47 = arith.cmpf ogt, %45, %46 : vector<128x48xf32>
    %cst_21 = arith.constant 0.00999999977 : f32
    %48 = vector.broadcast %cst_21 : f32 to vector<128x48xf32>
    %49 = arith.mulf %48, %45 : vector<128x48xf32>
    %50 = arith.select %47, %45, %49 : vector<128x48xi1>, vector<128x48xf32>
    %c0_22 = arith.constant 0 : index
    %c0_23 = arith.constant 0 : index
    %51 = vector.load %arg6[%c0_22, %c0_23] : memref<48x16xf32, #tpu.memory_space<vmem>>, vector<48x16xf32>
    %cst_24 = arith.constant dense<0.000000e+00> : vector<128x16xf32>
    %52 = tpu.matmul %50, %51, %cst_24 {dimension_numbers = #tpu.dot_dimension_numbers<[1], [0], [0], [1], [0, 0, 1, 1], [], []>} : vector<128x48xf32>, vector<48x16xf32>, vector<128x16xf32> -> vector<128x16xf32>
    %c0_25 = arith.constant 0 : index
    %c0_26 = arith.constant 0 : index
    %53 = vector.load %arg7[%c0_25, %c0_26] : memref<128x16xf32, #tpu.memory_space<vmem>>, vector<128x16xf32>
    tpu.vector_store %arg7[%c0_25, %c0_26], %52 {strides = array<i32>} : memref<128x16xf32, #tpu.memory_space<vmem>>, vector<128x16xf32>,
    %cst_27 = arith.constant dense<0.000000e+00> : vector<32xf32>
    %54 = vector.multi_reduction <add>, %32, %cst_27 [1] : vector<32x3xf32> to vector<32xf32>
    %55 = vector.shape_cast %54 : vector<32xf32> to vector<32x1xf32>
    %56 = tpu.concatenate %55, %36 in 1 : vector<32x1xf32>, vector<32x1xf32> -> vector<32x2xf32>
    %cst_28 = arith.constant dense<0.000000e+00> : vector<2x128xf32>
    %57 = tpu.matmul %56, %6, %cst_28 {dimension_numbers = #tpu.dot_dimension_numbers<[0], [0], [1], [1], [0, 1, 1, 1], [], []>} : vector<32x2xf32>, vector<32x128xf32>, vector<2x128xf32> -> vector<2x128xf32>
    %58 = vector.extract_strided_slice %57 {offsets = [0, 0], sizes = [1, 128], strides = [1, 1]} : vector<2x128xf32> to vector<1x128xf32>
    %59 = vector.extract_strided_slice %57 {offsets = [1, 0], sizes = [1, 128], strides = [1, 1]} : vector<2x128xf32> to vector<1x128xf32>
    %cst_29 = arith.constant 1.000000e+00 : f32
    %60 = vector.broadcast %cst_29 : f32 to vector<1x128xf32>
    %61 = arith.maximumf %59, %60 : vector<1x128xf32>
    %62 = arith.divf %58, %61 : vector<1x128xf32>
    %c0_30 = arith.constant 0 : index
    %c0_31 = arith.constant 0 : index
    %63 = vector.load %arg8[%c0_30, %c0_31] : memref<1x128xf32, #tpu.memory_space<vmem>>, vector<1x128xf32>
    tpu.vector_store %arg8[%c0_30, %c0_31], %62 {strides = array<i32>} : memref<1x128xf32, #tpu.memory_space<vmem>>, vector<1x128xf32>,
    return
  }
}

</mosaic_0001>

<llo_original>
// kernel: tpu_custom_call.1
$region0: #{tpu_custom_call.1}
  #allocation0 [shape = 'u32[]', space=smem, size = 0x4, offset = 0x4, fixed_abs, tag = 'smem constant byte address 0x4 - core index']
  #allocation1 [shape = 'u32[72,128]{1,0:T(1,128)}', space=vmem, size = 0x9000, scoped, tag = 'internal scratch']
  %s0 = inlined_call_operand.vmem [shape: f32[128,8], index: 0, kind: input, shape index: {}]
  %s1 = inlined_call_operand.vmem [shape: s32[32,2], index: 1, kind: input, shape index: {}]
  %s2 = inlined_call_operand.vmem [shape: f32[8,48], index: 2, kind: input, shape index: {}]
  %s3 = inlined_call_operand.vmem [shape: f32[1,48], index: 3, kind: input, shape index: {}]
  %s4 = inlined_call_operand.vmem [shape: f32[48,6], index: 4, kind: input, shape index: {}]
  %s5 = inlined_call_operand.vmem [shape: f32[3,48], index: 5, kind: input, shape index: {}]
  %s6 = inlined_call_operand.vmem [shape: f32[48,16], index: 6, kind: input, shape index: {}]
  %s7 = inlined_call_operand.vmem [shape: f32[128,16], index: 7, kind: output, shape index: {0}]
  %s8 = inlined_call_operand.hbm [shape: f32[1,128], index: 8, kind: output, shape index: {1}]
  %9 = xla_tuple %s7, %s8
  %s10 = sld [smem:[#allocation0]]
  $region46: #{tpu_custom_call.1} parent=0
    _
  %s12 = ssub.s32 1, %s10
  %s13 = scalar_select 0, %s12, %s10
  $region1: #{tpu_custom_call.1} parent=0
    #allocation2 [shape = 'u8[512]{0}', space=vmem, size = 0x400, scoped, tag = 'output window, operand 1, single buffered']
    #allocation3 [shape = 's32[1]{0}', space=sflag, size = 0x4, scoped, tag = 'scoped memory for tpu_custom_call.1']
    %14 = vsyncpa [#allocation3], 0
    // Predicated region
    $region2: #{tpu_custom_call.1} parent=1 // pred_check
      _
    $region3: #{tpu_custom_call.1} parent=1 // pred_check_branch
      %16 = sbr.rel (0) target = $region5
    $region4: #{tpu_custom_call.1} parent=1 // pred_region
      _
    $region5: #{tpu_custom_call.1} parent=1 // pred_fallthru
      _
    // Predicated region
    $region6: #{tpu_custom_call.1} parent=1 // pred_check
      _
    $region7: #{tpu_custom_call.1} parent=1 // pred_check_branch
      %18 = sbr.rel (0) target = $region9
    $region8: #{tpu_custom_call.1} parent=1 // pred_region
      _
    $region9: #{tpu_custom_call.1} parent=1 // pred_fallthru
      _
    // Predicated region
    $region10: #{tpu_custom_call.1} parent=1 // pred_check
      _
    $region11: #{tpu_custom_call.1} parent=1 // pred_check_branch
      %20 = sbr.rel (0) target = $region13
    $region12: #{tpu_custom_call.1} parent=1 // pred_region
      _
    $region13: #{tpu_custom_call.1} parent=1 // pred_fallthru
      _
    // Predicated region
    $region14: #{tpu_custom_call.1} parent=1 // pred_check
      _
    $region15: #{tpu_custom_call.1} parent=1 // pred_check_branch
      %22 = sbr.rel (0) target = $region17
    $region16: #{tpu_custom_call.1} parent=1 // pred_region
      _
    $region17: #{tpu_custom_call.1} parent=1 // pred_fallthru
      _
    // Predicated region
    $region18: #{tpu_custom_call.1} parent=1 // pred_check
      _
    $region19: #{tpu_custom_call.1} parent=1 // pred_check_branch
      %24 = sbr.rel (0) target = $region21
    $region20: #{tpu_custom_call.1} parent=1 // pred_region
      _
    $region21: #{tpu_custom_call.1} parent=1 // pred_fallthru
      _
    // Predicated region
    $region22: #{tpu_custom_call.1} parent=1 // pred_check
      _
    $region23: #{tpu_custom_call.1} parent=1 // pred_check_branch
      %26 = sbr.rel (0) target = $region25
    $region24: #{tpu_custom_call.1} parent=1 // pred_region
      _
    $region25: #{tpu_custom_call.1} parent=1 // pred_fallthru
      _
    // Predicated region
    $region26: #{tpu_custom_call.1} parent=1 // pred_check
      _
    $region27: #{tpu_custom_call.1} parent=1 // pred_check_branch
      %28 = sbr.rel (0) target = $region29
    $region28: #{tpu_custom_call.1} parent=1 // pred_region
      _
    $region29: #{tpu_custom_call.1} parent=1 // pred_fallthru
      _
    %v29 = vld [vmem:[%s1] sm:$0xff]
    %v30 = vld [vmem:[%s1 + $0x8] sm:$0xff]
    %v31 = vld [vmem:[%s1 + $0x10] sm:$0xff]
    %v32 = vld [vmem:[%s1 + $0x18] sm:$0xff]
    %v33 = vlaneseq
    %v34 = vand.u32 %v33, 127
    %35 = vset.pattern.permute.xlu0 0
    %36 = vperm.xlu0 %35, %v29
    %v37 = vpop.permute.xlu0 %36
    %38 = vset.pattern.permute.xlu0 0
    %39 = vperm.xlu0 %38, %v30
    %v40 = vpop.permute.xlu0 %39
    %41 = vset.pattern.permute.xlu0 0
    %42 = vperm.xlu0 %41, %v31
    %v43 = vpop.permute.xlu0 %42
    %44 = vset.pattern.permute.xlu0 0
    %45 = vperm.xlu0 %44, %v32
    %v46 = vpop.permute.xlu0 %45
    %vm47 = vcmp.eq.s32.totalorder %v34, %v37
    %vm48 = vcmp.eq.s32.totalorder %v34, %v40
    %vm49 = vcmp.eq.s32.totalorder %v34, %v43
    %vm50 = vcmp.eq.s32.totalorder %v34, %v46
    %v51 = vsel %vm47, 1, 0
    %v52 = vsel %vm48, 1, 0
    %v53 = vsel %vm49, 1, 0
    %v54 = vsel %vm50, 1, 0
    %v55 = vcvt.s32.f32 %v51
    %v56 = vcvt.s32.f32 %v52
    %v57 = vcvt.s32.f32 %v53
    %v58 = vcvt.s32.f32 %v54
    %59 = vset.pattern.permute.xlu0 1
    %60 = vperm.xlu0 %59, %v29
    %v61 = vpop.permute.xlu0 %60
    %62 = vset.pattern.permute.xlu0 1
    %63 = vperm.xlu0 %62, %v30
    %v64 = vpop.permute.xlu0 %63
    %65 = vset.pattern.permute.xlu0 1
    %66 = vperm.xlu0 %65, %v31
    %v67 = vpop.permute.xlu0 %66
    %68 = vset.pattern.permute.xlu0 1
    %69 = vperm.xlu0 %68, %v32
    %v70 = vpop.permute.xlu0 %69
    %vm71 = vcmp.eq.s32.totalorder %v34, %v61
    %vm72 = vcmp.eq.s32.totalorder %v34, %v64
    %vm73 = vcmp.eq.s32.totalorder %v34, %v67
    %vm74 = vcmp.eq.s32.totalorder %v34, %v70
    %v75 = vsel %vm71, 1, 0
    %v76 = vsel %vm72, 1, 0
    %v77 = vsel %vm73, 1, 0
    %v78 = vsel %vm74, 1, 0
    %v79 = vcvt.s32.f32 %v75
    %v80 = vcvt.s32.f32 %v76
    %v81 = vcvt.s32.f32 %v77
    %v82 = vcvt.s32.f32 %v78
    %v83 = vld [vmem:[%s0] sm:$0xff]
    %v84 = vld [vmem:[%s0 + $0x8] sm:$0xff]
    %v85 = vld [vmem:[%s0 + $0x10] sm:$0xff]
    %v86 = vld [vmem:[%s0 + $0x18] sm:$0xff]
    %v87 = vld [vmem:[%s0 + $0x20] sm:$0xff]
    %v88 = vld [vmem:[%s0 + $0x28] sm:$0xff]
    %v89 = vld [vmem:[%s0 + $0x30] sm:$0xff]
    %v90 = vld [vmem:[%s0 + $0x38] sm:$0xff]
    %v91 = vld [vmem:[%s0 + $0x40] sm:$0xff]
    %v92 = vld [vmem:[%s0 + $0x48] sm:$0xff]
    %v93 = vld [vmem:[%s0 + $0x50] sm:$0xff]
    %v94 = vld [vmem:[%s0 + $0x58] sm:$0xff]
    %v95 = vld [vmem:[%s0 + $0x60] sm:$0xff]
    %v96 = vld [vmem:[%s0 + $0x68] sm:$0xff]
    %v97 = vld [vmem:[%s0 + $0x70] sm:$0xff]
    %v98 = vld [vmem:[%s0 + $0x78] sm:$0xff]
    %v99 = vld [vmem:[%s2] sm:$0xff]
    %v100 = vld [vmem:[%s3] sm:$0x1]
    %v102 = vperm.slane %v100, 0
    %vm104 = vcmask 64512
    %v106 = vsel %vm104, %v83, 0
    %v109 = vsel %vm104, %v84, 0
    %v112 = vsel %vm104, %v85, 0
    %v115 = vsel %vm104, %v86, 0
    %v118 = vsel %vm104, %v87, 0
    %v121 = vsel %vm104, %v88, 0
    %v124 = vsel %vm104, %v89, 0
    %v127 = vsel %vm104, %v90, 0
    %v130 = vsel %vm104, %v91, 0
    %v133 = vsel %vm104, %v92, 0
    %v136 = vsel %vm104, %v93, 0
    %v139 = vsel %vm104, %v94, 0
    %v142 = vsel %vm104, %v95, 0
    %v145 = vsel %vm104, %v96, 0
    %v148 = vsel %vm104, %v97, 0
    %v151 = vsel %vm104, %v98, 0
    %153 = vmatpush.msra.mxu0 0.0
    %154 = vmatpush.msra.mxu0 0.0
    %155 = vmatpush.msra.mxu0 0.0
    %156 = vmatpush.msra.mxu0 0.0
    %157 = vmatpush.msra.mxu0 0.0
    %158 = vmatpush.msra.mxu0 0.0
    %159 = vmatpush.msra.mxu0 0.0
    %160 = vmatpush.msra.mxu0 0.0
    %161 = vmatpush.msra.mxu0 0.0
    %162 = vmatpush.msra.mxu0 0.0
    %163 = vmatpush.msra.mxu0 0.0
    %164 = vmatpush.msra.mxu0 0.0
    %165 = vmatpush.msra.mxu0 0.0
    %166 = vmatpush.msra.mxu0 0.0
    %167 = vmatpush.msra.mxu0 0.0
    %168 = vmatpush.msra.mxu0 %v99
    %169 = vmatmul.f32.gmra.mxu0 %v106
    %v170 = vpop.f32.mrf.mxu0
    %v171 = vadd.f32 %v102, %v170
    %172 = vmatmul.f32.gmra.mxu0 %v109
    %v173 = vpop.f32.mrf.mxu0
    %v174 = vadd.f32 %v102, %v173
    %175 = vmatmul.f32.gmra.mxu0 %v112
    %v176 = vpop.f32.mrf.mxu0
    %v177 = vadd.f32 %v102, %v176
    %178 = vmatmul.f32.gmra.mxu0 %v115
    %v179 = vpop.f32.mrf.mxu0
    %v180 = vadd.f32 %v102, %v179
    %181 = vmatmul.f32.gmra.mxu0 %v118
    %v182 = vpop.f32.mrf.mxu0
    %v183 = vadd.f32 %v102, %v182
    %184 = vmatmul.f32.gmra.mxu0 %v121
    %v185 = vpop.f32.mrf.mxu0
    %v186 = vadd.f32 %v102, %v185
    %187 = vmatmul.f32.gmra.mxu0 %v124
    %v188 = vpop.f32.mrf.mxu0
    %v189 = vadd.f32 %v102, %v188
    %190 = vmatmul.f32.gmra.mxu0 %v127
    %v191 = vpop.f32.mrf.mxu0
    %v192 = vadd.f32 %v102, %v191
    %193 = vmatmul.f32.gmra.mxu0 %v130
    %v194 = vpop.f32.mrf.mxu0
    %v195 = vadd.f32 %v102, %v194
    %196 = vmatmul.f32.gmra.mxu0 %v133
    %v197 = vpop.f32.mrf.mxu0
    %v198 = vadd.f32 %v102, %v197
    %199 = vmatmul.f32.gmra.mxu0 %v136
    %v200 = vpop.f32.mrf.mxu0
    %v201 = vadd.f32 %v102, %v200
    %202 = vmatmul.f32.gmra.mxu0 %v139
    %v203 = vpop.f32.mrf.mxu0
    %v204 = vadd.f32 %v102, %v203
    %205 = vmatmul.f32.gmra.mxu0 %v142
    %v206 = vpop.f32.mrf.mxu0
    %v207 = vadd.f32 %v102, %v206
    %208 = vmatmul.f32.gmra.mxu0 %v145
    %v209 = vpop.f32.mrf.mxu0
    %v210 = vadd.f32 %v102, %v209
    %211 = vmatmul.f32.gmra.mxu0 %v148
    %v212 = vpop.f32.mrf.mxu0
    %v213 = vadd.f32 %v102, %v212
    %214 = vmatmul.f32.gmra.mxu0 %v151
    %v215 = vpop.f32.mrf.mxu0
    %v216 = vadd.f32 %v102, %v215
    %217 = vdwg.mxu0
    %v218 = vld [vmem:[%s4] sm:$0xff]
    %v219 = vld [vmem:[%s4 + $0x8] sm:$0xff]
    %v220 = vld [vmem:[%s4 + $0x10] sm:$0xff]
    %v221 = vld [vmem:[%s4 + $0x18] sm:$0xff]
    %v222 = vld [vmem:[%s4 + $0x20] sm:$0xff]
    %v223 = vld [vmem:[%s4 + $0x28] sm:$0xff]
    %vm224 = vcmask 392192
    %v226 = vsel %vm224, %v171, 0
    %v229 = vsel %vm224, %v174, 0
    %v232 = vsel %vm224, %v177, 0
    %v235 = vsel %vm224, %v180, 0
    %v238 = vsel %vm224, %v183, 0
    %v241 = vsel %vm224, %v186, 0
    %v244 = vsel %vm224, %v189, 0
    %v247 = vsel %vm224, %v192, 0
    %v250 = vsel %vm224, %v195, 0
    %v253 = vsel %vm224, %v198, 0
    %v256 = vsel %vm224, %v201, 0
    %v259 = vsel %vm224, %v204, 0
    %v262 = vsel %vm224, %v207, 0
    %v265 = vsel %vm224, %v210, 0
    %v268 = vsel %vm224, %v213, 0
    %v271 = vsel %vm224, %v216, 0
    %273 = vmatpush.msra.mxu0 0.0
    %274 = vmatpush.msra.mxu0 0.0
    %275 = vmatpush.msra.mxu0 0.0
    %276 = vmatpush.msra.mxu0 0.0
    %277 = vmatpush.msra.mxu0 0.0
    %278 = vmatpush.msra.mxu0 0.0
    %279 = vmatpush.msra.mxu0 0.0
    %280 = vmatpush.msra.mxu0 0.0
    %281 = vmatpush.msra.mxu0 0.0
    %282 = vmatpush.msra.mxu0 0.0
    %283 = vmatpush.msra.mxu0 %v223
    %284 = vmatpush.msra.mxu0 %v222
    %285 = vmatpush.msra.mxu0 %v221
    %286 = vmatpush.msra.mxu0 %v220
    %287 = vmatpush.msra.mxu0 %v219
    %288 = vmatpush.msra.mxu0 %v218
    %289 = vmatmul.f32.gmra.mxu0 %v226
    %v290 = vpop.f32.mrf.mxu0
    %v291 = vadd.f32 0.0, %v290
    %292 = vmatmul.f32.gmra.mxu0 %v229
    %v293 = vpop.f32.mrf.mxu0
    %v294 = vadd.f32 0.0, %v293
    %295 = vmatmul.f32.gmra.mxu0 %v232
    %v296 = vpop.f32.mrf.mxu0
    %v297 = vadd.f32 0.0, %v296
    %298 = vmatmul.f32.gmra.mxu0 %v235
    %v299 = vpop.f32.mrf.mxu0
    %v300 = vadd.f32 0.0, %v299
    %301 = vmatmul.f32.gmra.mxu0 %v238
    %v302 = vpop.f32.mrf.mxu0
    %v303 = vadd.f32 0.0, %v302
    %304 = vmatmul.f32.gmra.mxu0 %v241
    %v305 = vpop.f32.mrf.mxu0
    %v306 = vadd.f32 0.0, %v305
    %307 = vmatmul.f32.gmra.mxu0 %v244
    %v308 = vpop.f32.mrf.mxu0
    %v309 = vadd.f32 0.0, %v308
    %310 = vmatmul.f32.gmra.mxu0 %v247
    %v311 = vpop.f32.mrf.mxu0
    %v312 = vadd.f32 0.0, %v311
    %313 = vmatmul.f32.gmra.mxu0 %v250
    %v314 = vpop.f32.mrf.mxu0
    %v315 = vadd.f32 0.0, %v314
    %316 = vmatmul.f32.gmra.mxu0 %v253
    %v317 = vpop.f32.mrf.mxu0
    %v318 = vadd.f32 0.0, %v317
    %319 = vmatmul.f32.gmra.mxu0 %v256
    %v320 = vpop.f32.mrf.mxu0
    %v321 = vadd.f32 0.0, %v320
    %322 = vmatmul.f32.gmra.mxu0 %v259
    %v323 = vpop.f32.mrf.mxu0
    %v324 = vadd.f32 0.0, %v323
    %325 = vmatmul.f32.gmra.mxu0 %v262
    %v326 = vpop.f32.mrf.mxu0
    %v327 = vadd.f32 0.0, %v326
    %328 = vmatmul.f32.gmra.mxu0 %v265
    %v329 = vpop.f32.mrf.mxu0
    %v330 = vadd.f32 0.0, %v329
    %331 = vmatmul.f32.gmra.mxu0 %v268
    %v332 = vpop.f32.mrf.mxu0
    %v333 = vadd.f32 0.0, %v332
    %334 = vmatmul.f32.gmra.mxu0 %v271
    %v335 = vpop.f32.mrf.mxu0
    %v336 = vadd.f32 0.0, %v335
    %337 = vdwg.mxu0
    %354 = vrot.lane.b32.xlu0 %v291, 48
    %v355 = vpop.permute.xlu0 %354
    %356 = vrot.lane.b32.xlu0 %v294, 48
    %v357 = vpop.permute.xlu0 %356
    %358 = vrot.lane.b32.xlu0 %v297, 48
    %v359 = vpop.permute.xlu0 %358
    %360 = vrot.lane.b32.xlu0 %v300, 48
    %v361 = vpop.permute.xlu0 %360
    %362 = vrot.lane.b32.xlu0 %v303, 48
    %v363 = vpop.permute.xlu0 %362
    %364 = vrot.lane.b32.xlu0 %v306, 48
    %v365 = vpop.permute.xlu0 %364
    %366 = vrot.lane.b32.xlu0 %v309, 48
    %v367 = vpop.permute.xlu0 %366
    %368 = vrot.lane.b32.xlu0 %v312, 48
    %v369 = vpop.permute.xlu0 %368
    %370 = vrot.lane.b32.xlu0 %v315, 48
    %v371 = vpop.permute.xlu0 %370
    %372 = vrot.lane.b32.xlu0 %v318, 48
    %v373 = vpop.permute.xlu0 %372
    %374 = vrot.lane.b32.xlu0 %v321, 48
    %v375 = vpop.permute.xlu0 %374
    %376 = vrot.lane.b32.xlu0 %v324, 48
    %v377 = vpop.permute.xlu0 %376
    %378 = vrot.lane.b32.xlu0 %v327, 48
    %v379 = vpop.permute.xlu0 %378
    %380 = vrot.lane.b32.xlu0 %v330, 48
    %v381 = vpop.permute.xlu0 %380
    %382 = vrot.lane.b32.xlu0 %v333, 48
    %v383 = vpop.permute.xlu0 %382
    %384 = vrot.lane.b32.xlu0 %v336, 48
    %v385 = vpop.permute.xlu0 %384
    %v402 = vsel %vm224, %v171, %v355
    %v403 = vsel %vm224, %v174, %v357
    %v404 = vsel %vm224, %v177, %v359
    %v405 = vsel %vm224, %v180, %v361
    %v406 = vsel %vm224, %v183, %v363
    %v407 = vsel %vm224, %v186, %v365
    %v408 = vsel %vm224, %v189, %v367
    %v409 = vsel %vm224, %v192, %v369
    %v410 = vsel %vm224, %v195, %v371
    %v411 = vsel %vm224, %v198, %v373
    %v412 = vsel %vm224, %v201, %v375
    %v413 = vsel %vm224, %v204, %v377
    %v414 = vsel %vm224, %v207, %v379
    %v415 = vsel %vm224, %v210, %v381
    %v416 = vsel %vm224, %v213, %v383
    %v417 = vsel %vm224, %v216, %v385
    %418 = vmatpush.msra.mxu0 %v417
    %419 = vmatpush.msra.mxu0 %v416
    %420 = vmatpush.msra.mxu0 %v415
    %421 = vmatpush.msra.mxu0 %v414
    %422 = vmatpush.msra.mxu0 %v413
    %423 = vmatpush.msra.mxu0 %v412
    %424 = vmatpush.msra.mxu0 %v411
    %425 = vmatpush.msra.mxu0 %v410
    %426 = vmatpush.msra.mxu0 %v409
    %427 = vmatpush.msra.mxu0 %v408
    %428 = vmatpush.msra.mxu0 %v407
    %429 = vmatpush.msra.mxu0 %v406
    %430 = vmatpush.msra.mxu0 %v405
    %431 = vmatpush.msra.mxu0 %v404
    %432 = vmatpush.msra.mxu0 %v403
    %433 = vmatpush.msra.mxu0 %v402
    %434 = vmatmul.f32.gmra.mxu0 %v55
    %v435 = vpop.f32.mrf.mxu0
    %v436 = vadd.f32 0.0, %v435
    %437 = vmatmul.f32.gmra.mxu0 %v56
    %v438 = vpop.f32.mrf.mxu0
    %v439 = vadd.f32 0.0, %v438
    %440 = vmatmul.f32.gmra.mxu0 %v57
    %v441 = vpop.f32.mrf.mxu0
    %v442 = vadd.f32 0.0, %v441
    %443 = vmatmul.f32.gmra.mxu0 %v58
    %v444 = vpop.f32.mrf.mxu0
    %v445 = vadd.f32 0.0, %v444
    %446 = vdwg.mxu0
    %447 = vrot.lane.b32.xlu0 %v291, 125
    %v448 = vpop.permute.xlu0 %447
    %449 = vrot.lane.b32.xlu0 %v294, 125
    %v450 = vpop.permute.xlu0 %449
    %451 = vrot.lane.b32.xlu0 %v297, 125
    %v452 = vpop.permute.xlu0 %451
    %453 = vrot.lane.b32.xlu0 %v300, 125
    %v454 = vpop.permute.xlu0 %453
    %455 = vrot.lane.b32.xlu0 %v303, 125
    %v456 = vpop.permute.xlu0 %455
    %457 = vrot.lane.b32.xlu0 %v306, 125
    %v458 = vpop.permute.xlu0 %457
    %459 = vrot.lane.b32.xlu0 %v309, 125
    %v460 = vpop.permute.xlu0 %459
    %461 = vrot.lane.b32.xlu0 %v312, 125
    %v462 = vpop.permute.xlu0 %461
    %463 = vrot.lane.b32.xlu0 %v315, 125
    %v464 = vpop.permute.xlu0 %463
    %465 = vrot.lane.b32.xlu0 %v318, 125
    %v466 = vpop.permute.xlu0 %465
    %467 = vrot.lane.b32.xlu0 %v321, 125
    %v468 = vpop.permute.xlu0 %467
    %469 = vrot.lane.b32.xlu0 %v324, 125
    %v470 = vpop.permute.xlu0 %469
    %471 = vrot.lane.b32.xlu0 %v327, 125
    %v472 = vpop.permute.xlu0 %471
    %473 = vrot.lane.b32.xlu0 %v330, 125
    %v474 = vpop.permute.xlu0 %473
    %475 = vrot.lane.b32.xlu0 %v333, 125
    %v476 = vpop.permute.xlu0 %475
    %477 = vrot.lane.b32.xlu0 %v336, 125
    %v478 = vpop.permute.xlu0 %477
    %495 = vmatpush.msra.mxu0 %v478
    %496 = vmatpush.msra.mxu0 %v476
    %497 = vmatpush.msra.mxu0 %v474
    %498 = vmatpush.msra.mxu0 %v472
    %499 = vmatpush.msra.mxu0 %v470
    %500 = vmatpush.msra.mxu0 %v468
    %501 = vmatpush.msra.mxu0 %v466
    %502 = vmatpush.msra.mxu0 %v464
    %503 = vmatpush.msra.mxu0 %v462
    %504 = vmatpush.msra.mxu0 %v460
    %505 = vmatpush.msra.mxu0 %v458
    %506 = vmatpush.msra.mxu0 %v456
    %507 = vmatpush.msra.mxu0 %v454
    %508 = vmatpush.msra.mxu0 %v452
    %509 = vmatpush.msra.mxu0 %v450
    %510 = vmatpush.msra.mxu0 %v448
    %511 = vmatmul.f32.gmra.mxu0 %v79
    %v512 = vpop.f32.mrf.mxu0
    %v513 = vadd.f32 0.0, %v512
    %514 = vmatmul.f32.gmra.mxu0 %v80
    %v515 = vpop.f32.mrf.mxu0
    %v516 = vadd.f32 0.0, %v515
    %517 = vmatmul.f32.gmra.mxu0 %v81
    %v518 = vpop.f32.mrf.mxu0
    %v519 = vadd.f32 0.0, %v518
    %520 = vmatmul.f32.gmra.mxu0 %v82
    %v521 = vpop.f32.mrf.mxu0
    %v522 = vadd.f32 0.0, %v521
    %523 = vdwg.mxu0
    %528 = vrot.lane.b32.xlu0 %v513, 48
    %v529 = vpop.permute.xlu0 %528
    %530 = vrot.lane.b32.xlu0 %v516, 48
    %v531 = vpop.permute.xlu0 %530
    %532 = vrot.lane.b32.xlu0 %v519, 48
    %v533 = vpop.permute.xlu0 %532
    %534 = vrot.lane.b32.xlu0 %v522, 48
    %v535 = vpop.permute.xlu0 %534
    %v540 = vadd.f32 %v436, %v529
    %v541 = vadd.f32 %v439, %v531
    %v542 = vadd.f32 %v442, %v533
    %v543 = vadd.f32 %v445, %v535
    %vm544 = vcmp.gt.f32.partialorder %v540, 0.0
    %vm545 = vcmp.gt.f32.partialorder %v541, 0.0
    %vm546 = vcmp.gt.f32.partialorder %v542, 0.0
    %vm547 = vcmp.gt.f32.partialorder %v543, 0.0
    %v548 = vmul.f32 %v540, 0.01
    %v549 = vmul.f32 %v541, 0.01
    %v550 = vmul.f32 %v542, 0.01
    %v551 = vmul.f32 %v543, 0.01
    %v552 = vsel %vm544, %v540, %v548
    %v553 = vsel %vm545, %v541, %v549
    %v554 = vsel %vm546, %v542, %v550
    %v555 = vsel %vm547, %v543, %v551
    %v556 = vld [vmem:[%s5] sm:$0x7]
    %561 = vrot.lane.b32.xlu0 %v552, 80
    %v562 = vpop.permute.xlu0 %561
    %563 = vrot.lane.b32.xlu0 %v553, 80
    %v564 = vpop.permute.xlu0 %563
    %565 = vrot.lane.b32.xlu0 %v554, 80
    %v566 = vpop.permute.xlu0 %565
    %567 = vrot.lane.b32.xlu0 %v555, 80
    %v568 = vpop.permute.xlu0 %567
    %vm569 = vcmask 23552
    %v570 = vsel %vm569, %v562, 0
    %v572 = vsel %vm569, %v564, 0
    %v574 = vsel %vm569, %v566, 0
    %v576 = vsel %vm569, %v568, 0
    %vm578 = vcmask 1042432
    %v580 = vsel %vm578, %v556, 0
    %582 = vmatpush.msra.mxu0 0.0
    %583 = vmatpush.msra.mxu0 0.0
    %584 = vmatpush.msra.mxu0 0.0
    %585 = vmatpush.msra.mxu0 0.0
    %586 = vmatpush.msra.mxu0 0.0
    %587 = vmatpush.msra.mxu0 0.0
    %588 = vmatpush.msra.mxu0 0.0
    %589 = vmatpush.msra.mxu0 0.0
    %590 = vmatpush.msra.mxu0 0.0
    %591 = vmatpush.msra.mxu0 0.0
    %592 = vmatpush.msra.mxu0 0.0
    %593 = vmatpush.msra.mxu0 0.0
    %594 = vmatpush.msra.mxu0 0.0
    %595 = vmatpush.msra.mxu0 0.0
    %596 = vmatpush.msra.mxu0 0.0
    %597 = vmatpush.msra.mxu0 %v580
    %598 = vmatmul.f32.gmra.mxu0 %v570
    %v599 = vpop.f32.mrf.mxu0
    %v600 = vadd.f32 0.0, %v599
    %601 = vmatmul.f32.gmra.mxu0 %v572
    %v602 = vpop.f32.mrf.mxu0
    %v603 = vadd.f32 0.0, %v602
    %604 = vmatmul.f32.gmra.mxu0 %v574
    %v605 = vpop.f32.mrf.mxu0
    %v606 = vadd.f32 0.0, %v605
    %607 = vmatmul.f32.gmra.mxu0 %v576
    %v608 = vpop.f32.mrf.mxu0
    %v609 = vadd.f32 0.0, %v608
    %610 = vdwg.mxu0
    %v611 = vmul.f32 %v600, %v436
    %v612 = vmul.f32 %v603, %v439
    %v613 = vmul.f32 %v606, %v442
    %v614 = vmul.f32 %v609, %v445
    %v615 = vsel %vm224, %v611, 1.0
    %v616 = vsel %vm224, %v612, 1.0
    %v617 = vsel %vm224, %v613, 1.0
    %v618 = vsel %vm224, %v614, 1.0
    %619 = vxpose.xlu0.b32.start [1/16] %v79, 128
    %620 = vxpose.xlu0.b32.cont [2/16] %v80, 128
    %621 = vxpose.xlu0.b32.cont [3/16] %v81, 128
    %622 = vxpose.xlu0.b32.cont [4/16] %v82, 128
    %623 = vxpose.xlu0.b32.cont [5/16] 0.0, 128
    %624 = vxpose.xlu0.b32.cont [6/16] 0.0, 128
    %625 = vxpose.xlu0.b32.cont [7/16] 0.0, 128
    %626 = vxpose.xlu0.b32.cont [8/16] 0.0, 128
    %627 = vxpose.xlu0.b32.cont [9/16] 0.0, 128
    %628 = vxpose.xlu0.b32.cont [10/16] 0.0, 128
    %629 = vxpose.xlu0.b32.cont [11/16] 0.0, 128
    %630 = vxpose.xlu0.b32.cont [12/16] 0.0, 128
    %631 = vxpose.xlu0.b32.cont [13/16] 0.0, 128
    %632 = vxpose.xlu0.b32.cont [14/16] 0.0, 128
    %633 = vxpose.xlu0.b32.cont [15/16] 0.0, 128
    %634 = vxpose.xlu0.b32.end [16/16] 0.0, 128
    %v635 = vpop.trf.xlu0
    %v636 = vpop.trf.xlu0
    %v637 = vpop.trf.xlu0
    %v638 = vpop.trf.xlu0
    %v639 = vpop.trf.xlu0
    %v640 = vpop.trf.xlu0
    %v641 = vpop.trf.xlu0
    %v642 = vpop.trf.xlu0
    %v643 = vpop.trf.xlu0
    %v644 = vpop.trf.xlu0
    %v645 = vpop.trf.xlu0
    %v646 = vpop.trf.xlu0
    %v647 = vpop.trf.xlu0
    %v648 = vpop.trf.xlu0
    %v649 = vpop.trf.xlu0
    %v650 = vpop.trf.xlu0
    %vm651 = vcmask 261120
    %v653 = vsel %vm651, %v635, 0
    %v656 = vsel %vm651, %v636, 0
    %v659 = vsel %vm651, %v637, 0
    %v662 = vsel %vm651, %v638, 0
    %v665 = vsel %vm651, %v639, 0
    %v668 = vsel %vm651, %v640, 0
    %v671 = vsel %vm651, %v641, 0
    %v674 = vsel %vm651, %v642, 0
    %v677 = vsel %vm651, %v643, 0
    %v680 = vsel %vm651, %v644, 0
    %v683 = vsel %vm651, %v645, 0
    %v686 = vsel %vm651, %v646, 0
    %v689 = vsel %vm651, %v647, 0
    %v692 = vsel %vm651, %v648, 0
    %v695 = vsel %vm651, %v649, 0
    %v698 = vsel %vm651, %v650, 0
    %700 = vmatpush.msra.mxu0 0.0
    %701 = vmatpush.msra.mxu0 0.0
    %702 = vmatpush.msra.mxu0 0.0
    %703 = vmatpush.msra.mxu0 0.0
    %704 = vmatpush.msra.mxu0 0.0
    %705 = vmatpush.msra.mxu0 0.0
    %706 = vmatpush.msra.mxu0 0.0
    %707 = vmatpush.msra.mxu0 0.0
    %708 = vmatpush.msra.mxu0 0.0
    %709 = vmatpush.msra.mxu0 0.0
    %710 = vmatpush.msra.mxu0 0.0
    %711 = vmatpush.msra.mxu0 0.0
    %712 = vmatpush.msra.mxu0 %v618
    %713 = vmatpush.msra.mxu0 %v617
    %714 = vmatpush.msra.mxu0 %v616
    %715 = vmatpush.msra.mxu0 %v615
    %716 = vmatmul.f32.gmra.mxu0 %v653
    %v717 = vpop.f32.mrf.mxu0
    %v718 = vadd.f32 0.0, %v717
    %719 = vmatmul.f32.gmra.mxu0 %v656
    %v720 = vpop.f32.mrf.mxu0
    %v721 = vadd.f32 0.0, %v720
    %722 = vmatmul.f32.gmra.mxu0 %v659
    %v723 = vpop.f32.mrf.mxu0
    %v724 = vadd.f32 0.0, %v723
    %725 = vmatmul.f32.gmra.mxu0 %v662
    %v726 = vpop.f32.mrf.mxu0
    %v727 = vadd.f32 0.0, %v726
    %728 = vmatmul.f32.gmra.mxu0 %v665
    %v729 = vpop.f32.mrf.mxu0
    %v730 = vadd.f32 0.0, %v729
    %731 = vmatmul.f32.gmra.mxu0 %v668
    %v732 = vpop.f32.mrf.mxu0
    %v733 = vadd.f32 0.0, %v732
    %734 = vmatmul.f32.gmra.mxu0 %v671
    %v735 = vpop.f32.mrf.mxu0
    %v736 = vadd.f32 0.0, %v735
    %737 = vmatmul.f32.gmra.mxu0 %v674
    %v738 = vpop.f32.mrf.mxu0
    %v739 = vadd.f32 0.0, %v738
    %740 = vmatmul.f32.gmra.mxu0 %v677
    %v741 = vpop.f32.mrf.mxu0
    %v742 = vadd.f32 0.0, %v741
    %743 = vmatmul.f32.gmra.mxu0 %v680
    %v744 = vpop.f32.mrf.mxu0
    %v745 = vadd.f32 0.0, %v744
    %746 = vmatmul.f32.gmra.mxu0 %v683
    %v747 = vpop.f32.mrf.mxu0
    %v748 = vadd.f32 0.0, %v747
    %749 = vmatmul.f32.gmra.mxu0 %v686
    %v750 = vpop.f32.mrf.mxu0
    %v751 = vadd.f32 0.0, %v750
    %752 = vmatmul.f32.gmra.mxu0 %v689
    %v753 = vpop.f32.mrf.mxu0
    %v754 = vadd.f32 0.0, %v753
    %755 = vmatmul.f32.gmra.mxu0 %v692
    %v756 = vpop.f32.mrf.mxu0
    %v757 = vadd.f32 0.0, %v756
    %758 = vmatmul.f32.gmra.mxu0 %v695
    %v759 = vpop.f32.mrf.mxu0
    %v760 = vadd.f32 0.0, %v759
    %761 = vmatmul.f32.gmra.mxu0 %v698
    %v762 = vpop.f32.mrf.mxu0
    %v763 = vadd.f32 0.0, %v762
    %764 = vdwg.mxu0
    %v765 = vmax.f32 %v718, 1.0
    %v766 = vmax.f32 %v721, 1.0
    %v767 = vmax.f32 %v724, 1.0
    %v768 = vmax.f32 %v727, 1.0
    %v769 = vmax.f32 %v730, 1.0
    %v770 = vmax.f32 %v733, 1.0
    %v771 = vmax.f32 %v736, 1.0
    %v772 = vmax.f32 %v739, 1.0
    %v773 = vmax.f32 %v742, 1.0
    %v774 = vmax.f32 %v745, 1.0
    %v775 = vmax.f32 %v748, 1.0
    %v776 = vmax.f32 %v751, 1.0
    %v777 = vmax.f32 %v754, 1.0
    %v778 = vmax.f32 %v757, 1.0
    %v779 = vmax.f32 %v760, 1.0
    %v780 = vmax.f32 %v763, 1.0
    %782 = vset.pattern.permute.xlu0 48
    %783 = vperm.xlu0 %782, %v765
    %v784 = vpop.permute.xlu0 %783
    %787 = vset.pattern.permute.xlu0 48
    %788 = vperm.xlu0 %787, %v766
    %v789 = vpop.permute.xlu0 %788
    %792 = vset.pattern.permute.xlu0 48
    %793 = vperm.xlu0 %792, %v767
    %v794 = vpop.permute.xlu0 %793
    %797 = vset.pattern.permute.xlu0 48
    %798 = vperm.xlu0 %797, %v768
    %v799 = vpop.permute.xlu0 %798
    %802 = vset.pattern.permute.xlu0 48
    %803 = vperm.xlu0 %802, %v769
    %v804 = vpop.permute.xlu0 %803
    %807 = vset.pattern.permute.xlu0 48
    %808 = vperm.xlu0 %807, %v770
    %v809 = vpop.permute.xlu0 %808
    %812 = vset.pattern.permute.xlu0 48
    %813 = vperm.xlu0 %812, %v771
    %v814 = vpop.permute.xlu0 %813
    %817 = vset.pattern.permute.xlu0 48
    %818 = vperm.xlu0 %817, %v772
    %v819 = vpop.permute.xlu0 %818
    %822 = vset.pattern.permute.xlu0 48
    %823 = vperm.xlu0 %822, %v773
    %v824 = vpop.permute.xlu0 %823
    %827 = vset.pattern.permute.xlu0 48
    %828 = vperm.xlu0 %827, %v774
    %v829 = vpop.permute.xlu0 %828
    %832 = vset.pattern.permute.xlu0 48
    %833 = vperm.xlu0 %832, %v775
    %v834 = vpop.permute.xlu0 %833
    %837 = vset.pattern.permute.xlu0 48
    %838 = vperm.xlu0 %837, %v776
    %v839 = vpop.permute.xlu0 %838
    %842 = vset.pattern.permute.xlu0 48
    %843 = vperm.xlu0 %842, %v777
    %v844 = vpop.permute.xlu0 %843
    %847 = vset.pattern.permute.xlu0 48
    %848 = vperm.xlu0 %847, %v778
    %v849 = vpop.permute.xlu0 %848
    %852 = vset.pattern.permute.xlu0 48
    %853 = vperm.xlu0 %852, %v779
    %v854 = vpop.permute.xlu0 %853
    %857 = vset.pattern.permute.xlu0 48
    %858 = vperm.xlu0 %857, %v780
    %v859 = vpop.permute.xlu0 %858
    %v861 = vrcp.pop %v784
    %v862 = vmul.f32 %v784, %v861
    %v863 = vsub.f32 1.0, %v862
    %v864 = vmul.f32 %v861, %v863
    %v865 = vadd.f32 %v861, %v864
    %vm866 = vweird.f32 %v784
    %vm867 = vweird.f32 %v861
    %vm868 = vmor %vm866, %vm867
    %v869 = vsel %vm868, %v861, %v865
    %v870 = vand.u32 2147483647, %v784
    %vm871 = vcmp.eq.f32.partialorder %v870, 8.507059e+37
    %v872 = vand.u32 %v784, 2147483648
    %v873 = vor.u32 1.1754944e-38, %v872
    %v874 = vsel %vm871, %v873, %v869
    %v875 = vmul.f32 %v718, %v874
    %v876 = vrcp.pop %v789
    %v877 = vmul.f32 %v789, %v876
    %v878 = vsub.f32 1.0, %v877
    %v879 = vmul.f32 %v876, %v878
    %v880 = vadd.f32 %v876, %v879
    %vm881 = vweird.f32 %v789
    %vm882 = vweird.f32 %v876
    %vm883 = vmor %vm881, %vm882
    %v884 = vsel %vm883, %v876, %v880
    %v885 = vand.u32 2147483647, %v789
    %vm886 = vcmp.eq.f32.partialorder %v885, 8.507059e+37
    %v887 = vand.u32 %v789, 2147483648
    %v888 = vor.u32 1.1754944e-38, %v887
    %v889 = vsel %vm886, %v888, %v884
    %v890 = vmul.f32 %v721, %v889
    %v891 = vrcp.pop %v794
    %v892 = vmul.f32 %v794, %v891
    %v893 = vsub.f32 1.0, %v892
    %v894 = vmul.f32 %v891, %v893
    %v895 = vadd.f32 %v891, %v894
    %vm896 = vweird.f32 %v794
    %vm897 = vweird.f32 %v891
    %vm898 = vmor %vm896, %vm897
    %v899 = vsel %vm898, %v891, %v895
    %v900 = vand.u32 2147483647, %v794
    %vm901 = vcmp.eq.f32.partialorder %v900, 8.507059e+37
    %v902 = vand.u32 %v794, 2147483648
    %v903 = vor.u32 1.1754944e-38, %v902
    %v904 = vsel %vm901, %v903, %v899
    %v905 = vmul.f32 %v724, %v904
    %v906 = vrcp.pop %v799
    %v907 = vmul.f32 %v799, %v906
    %v908 = vsub.f32 1.0, %v907
    %v909 = vmul.f32 %v906, %v908
    %v910 = vadd.f32 %v906, %v909
    %vm911 = vweird.f32 %v799
    %vm912 = vweird.f32 %v906
    %vm913 = vmor %vm911, %vm912
    %v914 = vsel %vm913, %v906, %v910
    %v915 = vand.u32 2147483647, %v799
    %vm916 = vcmp.eq.f32.partialorder %v915, 8.507059e+37
    %v917 = vand.u32 %v799, 2147483648
    %v918 = vor.u32 1.1754944e-38, %v917
    %v919 = vsel %vm916, %v918, %v914
    %v920 = vmul.f32 %v727, %v919
    %v921 = vrcp.pop %v804
    %v922 = vmul.f32 %v804, %v921
    %v923 = vsub.f32 1.0, %v922
    %v924 = vmul.f32 %v921, %v923
    %v925 = vadd.f32 %v921, %v924
    %vm926 = vweird.f32 %v804
    %vm927 = vweird.f32 %v921
    %vm928 = vmor %vm926, %vm927
    %v929 = vsel %vm928, %v921, %v925
    %v930 = vand.u32 2147483647, %v804
    %vm931 = vcmp.eq.f32.partialorder %v930, 8.507059e+37
    %v932 = vand.u32 %v804, 2147483648
    %v933 = vor.u32 1.1754944e-38, %v932
    %v934 = vsel %vm931, %v933, %v929
    %v935 = vmul.f32 %v730, %v934
    %v936 = vrcp.pop %v809
    %v937 = vmul.f32 %v809, %v936
    %v938 = vsub.f32 1.0, %v937
    %v939 = vmul.f32 %v936, %v938
    %v940 = vadd.f32 %v936, %v939
    %vm941 = vweird.f32 %v809
    %vm942 = vweird.f32 %v936
    %vm943 = vmor %vm941, %vm942
    %v944 = vsel %vm943, %v936, %v940
    %v945 = vand.u32 2147483647, %v809
    %vm946 = vcmp.eq.f32.partialorder %v945, 8.507059e+37
    %v947 = vand.u32 %v809, 2147483648
    %v948 = vor.u32 1.1754944e-38, %v947
    %v949 = vsel %vm946, %v948, %v944
    %v950 = vmul.f32 %v733, %v949
    %v951 = vrcp.pop %v814
    %v952 = vmul.f32 %v814, %v951
    %v953 = vsub.f32 1.0, %v952
    %v954 = vmul.f32 %v951, %v953
    %v955 = vadd.f32 %v951, %v954
    %vm956 = vweird.f32 %v814
    %vm957 = vweird.f32 %v951
    %vm958 = vmor %vm956, %vm957
    %v959 = vsel %vm958, %v951, %v955
    %v960 = vand.u32 2147483647, %v814
    %vm961 = vcmp.eq.f32.partialorder %v960, 8.507059e+37
    %v962 = vand.u32 %v814, 2147483648
    %v963 = vor.u32 1.1754944e-38, %v962
    %v964 = vsel %vm961, %v963, %v959
    %v965 = vmul.f32 %v736, %v964
    %v966 = vrcp.pop %v819
    %v967 = vmul.f32 %v819, %v966
    %v968 = vsub.f32 1.0, %v967
    %v969 = vmul.f32 %v966, %v968
    %v970 = vadd.f32 %v966, %v969
    %vm971 = vweird.f32 %v819
    %vm972 = vweird.f32 %v966
    %vm973 = vmor %vm971, %vm972
    %v974 = vsel %vm973, %v966, %v970
    %v975 = vand.u32 2147483647, %v819
    %vm976 = vcmp.eq.f32.partialorder %v975, 8.507059e+37
    %v977 = vand.u32 %v819, 2147483648
    %v978 = vor.u32 1.1754944e-38, %v977
    %v979 = vsel %vm976, %v978, %v974
    %v980 = vmul.f32 %v739, %v979
    %v981 = vrcp.pop %v824
    %v982 = vmul.f32 %v824, %v981
    %v983 = vsub.f32 1.0, %v982
    %v984 = vmul.f32 %v981, %v983
    %v985 = vadd.f32 %v981, %v984
    %vm986 = vweird.f32 %v824
    %vm987 = vweird.f32 %v981
    %vm988 = vmor %vm986, %vm987
    %v989 = vsel %vm988, %v981, %v985
    %v990 = vand.u32 2147483647, %v824
    %vm991 = vcmp.eq.f32.partialorder %v990, 8.507059e+37
    %v992 = vand.u32 %v824, 2147483648
    %v993 = vor.u32 1.1754944e-38, %v992
    %v994 = vsel %vm991, %v993, %v989
    %v995 = vmul.f32 %v742, %v994
    %v996 = vrcp.pop %v829
    %v997 = vmul.f32 %v829, %v996
    %v998 = vsub.f32 1.0, %v997
    %v999 = vmul.f32 %v996, %v998
    %v1000 = vadd.f32 %v996, %v999
    %vm1001 = vweird.f32 %v829
    %vm1002 = vweird.f32 %v996
    %vm1003 = vmor %vm1001, %vm1002
    %v1004 = vsel %vm1003, %v996, %v1000
    %v1005 = vand.u32 2147483647, %v829
    %vm1006 = vcmp.eq.f32.partialorder %v1005, 8.507059e+37
    %v1007 = vand.u32 %v829, 2147483648
    %v1008 = vor.u32 1.1754944e-38, %v1007
    %v1009 = vsel %vm1006, %v1008, %v1004
    %v1010 = vmul.f32 %v745, %v1009
    %v1011 = vrcp.pop %v834
    %v1012 = vmul.f32 %v834, %v1011
    %v1013 = vsub.f32 1.0, %v1012
    %v1014 = vmul.f32 %v1011, %v1013
    %v1015 = vadd.f32 %v1011, %v1014
    %vm1016 = vweird.f32 %v834
    %vm1017 = vweird.f32 %v1011
    %vm1018 = vmor %vm1016, %vm1017
    %v1019 = vsel %vm1018, %v1011, %v1015
    %v1020 = vand.u32 2147483647, %v834
    %vm1021 = vcmp.eq.f32.partialorder %v1020, 8.507059e+37
    %v1022 = vand.u32 %v834, 2147483648
    %v1023 = vor.u32 1.1754944e-38, %v1022
    %v1024 = vsel %vm1021, %v1023, %v1019
    %v1025 = vmul.f32 %v748, %v1024
    %v1026 = vrcp.pop %v839
    %v1027 = vmul.f32 %v839, %v1026
    %v1028 = vsub.f32 1.0, %v1027
    %v1029 = vmul.f32 %v1026, %v1028
    %v1030 = vadd.f32 %v1026, %v1029
    %vm1031 = vweird.f32 %v839
    %vm1032 = vweird.f32 %v1026
    %vm1033 = vmor %vm1031, %vm1032
    %v1034 = vsel %vm1033, %v1026, %v1030
    %v1035 = vand.u32 2147483647, %v839
    %vm1036 = vcmp.eq.f32.partialorder %v1035, 8.507059e+37
    %v1037 = vand.u32 %v839, 2147483648
    %v1038 = vor.u32 1.1754944e-38, %v1037
    %v1039 = vsel %vm1036, %v1038, %v1034
    %v1040 = vmul.f32 %v751, %v1039
    %v1041 = vrcp.pop %v844
    %v1042 = vmul.f32 %v844, %v1041
    %v1043 = vsub.f32 1.0, %v1042
    %v1044 = vmul.f32 %v1041, %v1043
    %v1045 = vadd.f32 %v1041, %v1044
    %vm1046 = vweird.f32 %v844
    %vm1047 = vweird.f32 %v1041
    %vm1048 = vmor %vm1046, %vm1047
    %v1049 = vsel %vm1048, %v1041, %v1045
    %v1050 = vand.u32 2147483647, %v844
    %vm1051 = vcmp.eq.f32.partialorder %v1050, 8.507059e+37
    %v1052 = vand.u32 %v844, 2147483648
    %v1053 = vor.u32 1.1754944e-38, %v1052
    %v1054 = vsel %vm1051, %v1053, %v1049
    %v1055 = vmul.f32 %v754, %v1054
    %v1056 = vrcp.pop %v849
    %v1057 = vmul.f32 %v849, %v1056
    %v1058 = vsub.f32 1.0, %v1057
    %v1059 = vmul.f32 %v1056, %v1058
    %v1060 = vadd.f32 %v1056, %v1059
    %vm1061 = vweird.f32 %v849
    %vm1062 = vweird.f32 %v1056
    %vm1063 = vmor %vm1061, %vm1062
    %v1064 = vsel %vm1063, %v1056, %v1060
    %v1065 = vand.u32 2147483647, %v849
    %vm1066 = vcmp.eq.f32.partialorder %v1065, 8.507059e+37
    %v1067 = vand.u32 %v849, 2147483648
    %v1068 = vor.u32 1.1754944e-38, %v1067
    %v1069 = vsel %vm1066, %v1068, %v1064
    %v1070 = vmul.f32 %v757, %v1069
    %v1071 = vrcp.pop %v854
    %v1072 = vmul.f32 %v854, %v1071
    %v1073 = vsub.f32 1.0, %v1072
    %v1074 = vmul.f32 %v1071, %v1073
    %v1075 = vadd.f32 %v1071, %v1074
    %vm1076 = vweird.f32 %v854
    %vm1077 = vweird.f32 %v1071
    %vm1078 = vmor %vm1076, %vm1077
    %v1079 = vsel %vm1078, %v1071, %v1075
    %v1080 = vand.u32 2147483647, %v854
    %vm1081 = vcmp.eq.f32.partialorder %v1080, 8.507059e+37
    %v1082 = vand.u32 %v854, 2147483648
    %v1083 = vor.u32 1.1754944e-38, %v1082
    %v1084 = vsel %vm1081, %v1083, %v1079
    %v1085 = vmul.f32 %v760, %v1084
    %v1086 = vrcp.pop %v859
    %v1087 = vmul.f32 %v859, %v1086
    %v1088 = vsub.f32 1.0, %v1087
    %v1089 = vmul.f32 %v1086, %v1088
    %v1090 = vadd.f32 %v1086, %v1089
    %vm1091 = vweird.f32 %v859
    %vm1092 = vweird.f32 %v1086
    %vm1093 = vmor %vm1091, %vm1092
    %v1094 = vsel %vm1093, %v1086, %v1090
    %v1095 = vand.u32 2147483647, %v859
    %vm1096 = vcmp.eq.f32.partialorder %v1095, 8.507059e+37
    %v1097 = vand.u32 %v859, 2147483648
    %v1098 = vor.u32 1.1754944e-38, %v1097
    %v1099 = vsel %vm1096, %v1098, %v1094
    %v1100 = vmul.f32 %v763, %v1099
    %v1101 = vadd.f32 %v171, %v875
    %v1102 = vadd.f32 %v174, %v890
    %v1103 = vadd.f32 %v177, %v905
    %v1104 = vadd.f32 %v180, %v920
    %v1105 = vadd.f32 %v183, %v935
    %v1106 = vadd.f32 %v186, %v950
    %v1107 = vadd.f32 %v189, %v965
    %v1108 = vadd.f32 %v192, %v980
    %v1109 = vadd.f32 %v195, %v995
    %v1110 = vadd.f32 %v198, %v1010
    %v1111 = vadd.f32 %v201, %v1025
    %v1112 = vadd.f32 %v204, %v1040
    %v1113 = vadd.f32 %v207, %v1055
    %v1114 = vadd.f32 %v210, %v1070
    %v1115 = vadd.f32 %v213, %v1085
    %v1116 = vadd.f32 %v216, %v1100
    %vm1117 = vcmp.gt.f32.partialorder %v1101, 0.0
    %vm1118 = vcmp.gt.f32.partialorder %v1102, 0.0
    %vm1119 = vcmp.gt.f32.partialorder %v1103, 0.0
    %vm1120 = vcmp.gt.f32.partialorder %v1104, 0.0
    %vm1121 = vcmp.gt.f32.partialorder %v1105, 0.0
    %vm1122 = vcmp.gt.f32.partialorder %v1106, 0.0
    %vm1123 = vcmp.gt.f32.partialorder %v1107, 0.0
    %vm1124 = vcmp.gt.f32.partialorder %v1108, 0.0
    %vm1125 = vcmp.gt.f32.partialorder %v1109, 0.0
    %vm1126 = vcmp.gt.f32.partialorder %v1110, 0.0
    %vm1127 = vcmp.gt.f32.partialorder %v1111, 0.0
    %vm1128 = vcmp.gt.f32.partialorder %v1112, 0.0
    %vm1129 = vcmp.gt.f32.partialorder %v1113, 0.0
    %vm1130 = vcmp.gt.f32.partialorder %v1114, 0.0
    %vm1131 = vcmp.gt.f32.partialorder %v1115, 0.0
    %vm1132 = vcmp.gt.f32.partialorder %v1116, 0.0
    %v1133 = vmul.f32 %v1101, 0.01
    %v1134 = vmul.f32 %v1102, 0.01
    %v1135 = vmul.f32 %v1103, 0.01
    %v1136 = vmul.f32 %v1104, 0.01
    %v1137 = vmul.f32 %v1105, 0.01
    %v1138 = vmul.f32 %v1106, 0.01
    %v1139 = vmul.f32 %v1107, 0.01
    %v1140 = vmul.f32 %v1108, 0.01
    %v1141 = vmul.f32 %v1109, 0.01
    %v1142 = vmul.f32 %v1110, 0.01
    %v1143 = vmul.f32 %v1111, 0.01
    %v1144 = vmul.f32 %v1112, 0.01
    %v1145 = vmul.f32 %v1113, 0.01
    %v1146 = vmul.f32 %v1114, 0.01
    %v1147 = vmul.f32 %v1115, 0.01
    %v1148 = vmul.f32 %v1116, 0.01
    %v1149 = vsel %vm1117, %v1101, %v1133
    %v1150 = vsel %vm1118, %v1102, %v1134
    %v1151 = vsel %vm1119, %v1103, %v1135
    %v1152 = vsel %vm1120, %v1104, %v1136
    %v1153 = vsel %vm1121, %v1105, %v1137
    %v1154 = vsel %vm1122, %v1106, %v1138
    %v1155 = vsel %vm1123, %v1107, %v1139
    %v1156 = vsel %vm1124, %v1108, %v1140
    %v1157 = vsel %vm1125, %v1109, %v1141
    %v1158 = vsel %vm1126, %v1110, %v1142
    %v1159 = vsel %vm1127, %v1111, %v1143
    %v1160 = vsel %vm1128, %v1112, %v1144
    %v1161 = vsel %vm1129, %v1113, %v1145
    %v1162 = vsel %vm1130, %v1114, %v1146
    %v1163 = vsel %vm1131, %v1115, %v1147
    %v1164 = vsel %vm1132, %v1116, %v1148
    %v1165 = vld [vmem:[%s6] sm:$0xff]
    %v1166 = vld [vmem:[%s6 + $0x8] sm:$0xff]
    %v1167 = vld [vmem:[%s6 + $0x10] sm:$0xff]
    %v1168 = vld [vmem:[%s6 + $0x18] sm:$0xff]
    %v1169 = vld [vmem:[%s6 + $0x20] sm:$0xff]
    %v1170 = vld [vmem:[%s6 + $0x28] sm:$0xff]
    %v1172 = vsel %vm224, %v1149, 0
    %v1175 = vsel %vm224, %v1150, 0
    %v1178 = vsel %vm224, %v1151, 0
    %v1181 = vsel %vm224, %v1152, 0
    %v1184 = vsel %vm224, %v1153, 0
    %v1187 = vsel %vm224, %v1154, 0
    %v1190 = vsel %vm224, %v1155, 0
    %v1193 = vsel %vm224, %v1156, 0
    %v1196 = vsel %vm224, %v1157, 0
    %v1199 = vsel %vm224, %v1158, 0
    %v1202 = vsel %vm224, %v1159, 0
    %v1205 = vsel %vm224, %v1160, 0
    %v1208 = vsel %vm224, %v1161, 0
    %v1211 = vsel %vm224, %v1162, 0
    %v1214 = vsel %vm224, %v1163, 0
    %v1217 = vsel %vm224, %v1164, 0
    %1219 = vmatpush.msra.mxu0 0.0
    %1220 = vmatpush.msra.mxu0 0.0
    %1221 = vmatpush.msra.mxu0 0.0
    %1222 = vmatpush.msra.mxu0 0.0
    %1223 = vmatpush.msra.mxu0 0.0
    %1224 = vmatpush.msra.mxu0 0.0
    %1225 = vmatpush.msra.mxu0 0.0
    %1226 = vmatpush.msra.mxu0 0.0
    %1227 = vmatpush.msra.mxu0 0.0
    %1228 = vmatpush.msra.mxu0 0.0
    %1229 = vmatpush.msra.mxu0 %v1170
    %1230 = vmatpush.msra.mxu0 %v1169
    %1231 = vmatpush.msra.mxu0 %v1168
    %1232 = vmatpush.msra.mxu0 %v1167
    %1233 = vmatpush.msra.mxu0 %v1166
    %1234 = vmatpush.msra.mxu0 %v1165
    %1235 = vmatmul.f32.gmra.mxu0 %v1172
    %v1236 = vpop.f32.mrf.mxu0
    %v1237 = vadd.f32 0.0, %v1236
    %1238 = vmatmul.f32.gmra.mxu0 %v1175
    %v1239 = vpop.f32.mrf.mxu0
    %v1240 = vadd.f32 0.0, %v1239
    %1241 = vmatmul.f32.gmra.mxu0 %v1178
    %v1242 = vpop.f32.mrf.mxu0
    %v1243 = vadd.f32 0.0, %v1242
    %1244 = vmatmul.f32.gmra.mxu0 %v1181
    %v1245 = vpop.f32.mrf.mxu0
    %v1246 = vadd.f32 0.0, %v1245
    %1247 = vmatmul.f32.gmra.mxu0 %v1184
    %v1248 = vpop.f32.mrf.mxu0
    %v1249 = vadd.f32 0.0, %v1248
    %1250 = vmatmul.f32.gmra.mxu0 %v1187
    %v1251 = vpop.f32.mrf.mxu0
    %v1252 = vadd.f32 0.0, %v1251
    %1253 = vmatmul.f32.gmra.mxu0 %v1190
    %v1254 = vpop.f32.mrf.mxu0
    %v1255 = vadd.f32 0.0, %v1254
    %1256 = vmatmul.f32.gmra.mxu0 %v1193
    %v1257 = vpop.f32.mrf.mxu0
    %v1258 = vadd.f32 0.0, %v1257
    %1259 = vmatmul.f32.gmra.mxu0 %v1196
    %v1260 = vpop.f32.mrf.mxu0
    %v1261 = vadd.f32 0.0, %v1260
    %1262 = vmatmul.f32.gmra.mxu0 %v1199
    %v1263 = vpop.f32.mrf.mxu0
    %v1264 = vadd.f32 0.0, %v1263
    %1265 = vmatmul.f32.gmra.mxu0 %v1202
    %v1266 = vpop.f32.mrf.mxu0
    %v1267 = vadd.f32 0.0, %v1266
    %1268 = vmatmul.f32.gmra.mxu0 %v1205
    %v1269 = vpop.f32.mrf.mxu0
    %v1270 = vadd.f32 0.0, %v1269
    %1271 = vmatmul.f32.gmra.mxu0 %v1208
    %v1272 = vpop.f32.mrf.mxu0
    %v1273 = vadd.f32 0.0, %v1272
    %1274 = vmatmul.f32.gmra.mxu0 %v1211
    %v1275 = vpop.f32.mrf.mxu0
    %v1276 = vadd.f32 0.0, %v1275
    %1277 = vmatmul.f32.gmra.mxu0 %v1214
    %v1278 = vpop.f32.mrf.mxu0
    %v1279 = vadd.f32 0.0, %v1278
    %1280 = vmatmul.f32.gmra.mxu0 %v1217
    %v1281 = vpop.f32.mrf.mxu0
    %v1282 = vadd.f32 0.0, %v1281
    %1283 = vdwg.mxu0
    %vm1284 = vcmask 130048
    %1285 = vst.msk [vmem:[%s7] sm:$0xff] %vm1284, %v1237
    %1286 = vst.msk [vmem:[%s7 + $0x8] sm:$0xff] %vm1284, %v1240
    %1287 = vst.msk [vmem:[%s7 + $0x10] sm:$0xff] %vm1284, %v1243
    %1288 = vst.msk [vmem:[%s7 + $0x18] sm:$0xff] %vm1284, %v1246
    %1289 = vst.msk [vmem:[%s7 + $0x20] sm:$0xff] %vm1284, %v1249
    %1290 = vst.msk [vmem:[%s7 + $0x28] sm:$0xff] %vm1284, %v1252
    %1291 = vst.msk [vmem:[%s7 + $0x30] sm:$0xff] %vm1284, %v1255
    %1292 = vst.msk [vmem:[%s7 + $0x38] sm:$0xff] %vm1284, %v1258
    %1293 = vst.msk [vmem:[%s7 + $0x40] sm:$0xff] %vm1284, %v1261
    %1294 = vst.msk [vmem:[%s7 + $0x48] sm:$0xff] %vm1284, %v1264
    %1295 = vst.msk [vmem:[%s7 + $0x50] sm:$0xff] %vm1284, %v1267
    %1296 = vst.msk [vmem:[%s7 + $0x58] sm:$0xff] %vm1284, %v1270
    %1297 = vst.msk [vmem:[%s7 + $0x60] sm:$0xff] %vm1284, %v1273
    %1298 = vst.msk [vmem:[%s7 + $0x68] sm:$0xff] %vm1284, %v1276
    %1299 = vst.msk [vmem:[%s7 + $0x70] sm:$0xff] %vm1284, %v1279
    %1300 = vst.msk [vmem:[%s7 + $0x78] sm:$0xff] %vm1284, %v1282
    %v1305 = vsel %vm569, %v562, 0.0
    %1306 = vadd.xlane.f32.xlu0 %v1305
    %v1307 = vpop.xlane.xlu0 %1306
    %v1308 = vsel %vm569, %v564, 0.0
    %1309 = vadd.xlane.f32.xlu0 %v1308
    %v1310 = vpop.xlane.xlu0 %1309
    %v1311 = vsel %vm569, %v566, 0.0
    %1312 = vadd.xlane.f32.xlu0 %v1311
    %v1313 = vpop.xlane.xlu0 %1312
    %v1314 = vsel %vm569, %v568, 0.0
    %1315 = vadd.xlane.f32.xlu0 %v1314
    %v1316 = vpop.xlane.xlu0 %1315
    %vm1317 = vcmask 7168
    %v1318 = vsel %vm1317, %v1307, 1.0
    %v1319 = vsel %vm1317, %v1310, 1.0
    %v1320 = vsel %vm1317, %v1313, 1.0
    %v1321 = vsel %vm1317, %v1316, 1.0
    %1322 = vxpose.xlu0.b32.start [1/16] %v1318, 128
    %1323 = vxpose.xlu0.b32.cont [2/16] %v1319, 128
    %1324 = vxpose.xlu0.b32.cont [3/16] %v1320, 128
    %1325 = vxpose.xlu0.b32.cont [4/16] %v1321, 128
    %1326 = vxpose.xlu0.b32.cont [5/16] 0.0, 128
    %1327 = vxpose.xlu0.b32.cont [6/16] 0.0, 128
    %1328 = vxpose.xlu0.b32.cont [7/16] 0.0, 128
    %1329 = vxpose.xlu0.b32.cont [8/16] 0.0, 128
    %1330 = vxpose.xlu0.b32.cont [9/16] 0.0, 128
    %1331 = vxpose.xlu0.b32.cont [10/16] 0.0, 128
    %1332 = vxpose.xlu0.b32.cont [11/16] 0.0, 128
    %1333 = vxpose.xlu0.b32.cont [12/16] 0.0, 128
    %1334 = vxpose.xlu0.b32.cont [13/16] 0.0, 128
    %1335 = vxpose.xlu0.b32.cont [14/16] 0.0, 128
    %1336 = vxpose.xlu0.b32.cont [15/16] 0.0, 128
    %1337 = vxpose.xlu0.b32.end [16/16] 0.0, 128
    %v1338 = vpop.trf.xlu0
    %v1339 = vpop.trf.xlu0
    %v1340 = vpop.trf.xlu0
    %v1341 = vpop.trf.xlu0
    %v1342 = vpop.trf.xlu0
    %v1343 = vpop.trf.xlu0
    %v1344 = vpop.trf.xlu0
    %v1345 = vpop.trf.xlu0
    %v1346 = vpop.trf.xlu0
    %v1347 = vpop.trf.xlu0
    %v1348 = vpop.trf.xlu0
    %v1349 = vpop.trf.xlu0
    %v1350 = vpop.trf.xlu0
    %v1351 = vpop.trf.xlu0
    %v1352 = vpop.trf.xlu0
    %v1353 = vpop.trf.xlu0
    %v1355 = vsel %vm651, %v1338, 0
    %1357 = vmatpush.msra.mxu0 0.0
    %1358 = vmatpush.msra.mxu0 0.0
    %1359 = vmatpush.msra.mxu0 0.0
    %1360 = vmatpush.msra.mxu0 0.0
    %1361 = vmatpush.msra.mxu0 0.0
    %1362 = vmatpush.msra.mxu0 0.0
    %1363 = vmatpush.msra.mxu0 0.0
    %1364 = vmatpush.msra.mxu0 0.0
    %1365 = vmatpush.msra.mxu0 0.0
    %1366 = vmatpush.msra.mxu0 0.0
    %1367 = vmatpush.msra.mxu0 0.0
    %1368 = vmatpush.msra.mxu0 0.0
    %1369 = vmatpush.msra.mxu0 %v58
    %1370 = vmatpush.msra.mxu0 %v57
    %1371 = vmatpush.msra.mxu0 %v56
    %1372 = vmatpush.msra.mxu0 %v55
    %1373 = vmatmul.f32.gmra.mxu0 %v1355
    %v1374 = vpop.f32.mrf.mxu0
    %v1375 = vadd.f32 0.0, %v1374
    %1376 = vdwg.mxu0
    %v1377 = vmax.f32 %v1375, 1.0
    %v1379 = vrot.slane %v1377, 1
    %v1381 = vrcp.pop %v1379
    %v1382 = vmul.f32 %v1379, %v1381
    %v1383 = vsub.f32 1.0, %v1382
    %v1384 = vmul.f32 %v1381, %v1383
    %v1385 = vadd.f32 %v1381, %v1384
    %vm1386 = vweird.f32 %v1379
    %vm1387 = vweird.f32 %v1381
    %vm1388 = vmor %vm1386, %vm1387
    %v1389 = vsel %vm1388, %v1381, %v1385
    %v1390 = vand.u32 2147483647, %v1379
    %vm1391 = vcmp.eq.f32.partialorder %v1390, 8.507059e+37
    %v1392 = vand.u32 %v1379, 2147483648
    %v1393 = vor.u32 1.1754944e-38, %v1392
    %v1394 = vsel %vm1391, %v1393, %v1389
    %v1395 = vmul.f32 %v1375, %v1394
    %1396 = vst [vmem:[#allocation2] sm:$0x1] %v1395
    // Predicated region
    $region30: #{tpu_custom_call.1} parent=1 // pred_check
      _
    $region31: #{tpu_custom_call.1} parent=1 // pred_check_branch
      %1398 = sbr.rel (0) target = $region33
    $region32: #{tpu_custom_call.1} parent=1 // pred_region
      _
    $region33: #{tpu_custom_call.1} parent=1 // pred_fallthru
      _
    // Predicated region
    $region34: #{tpu_custom_call.1} parent=1 // pred_check
      _
    $region35: #{tpu_custom_call.1} parent=1 // pred_check_branch
      %1400 = sbr.rel (0) target = $region37
    $region36: #{tpu_custom_call.1} parent=1 // pred_region
      %1402 = vsyncadd [#allocation3], 0
      %s1404 = sshll.u32 [#allocation2], 4
      %s1405 = int_to_ptr.vmem [resolvable:$true] %s1404
      %s1406 = sshll.u32 %s8, 4
      %s1407 = int_to_ptr.hbm [resolvable:$true] %s1406
      %1409 = dma.vmem_to_hbm [thread:$0]  %s1405, 16, %s1407, [#allocation3]
    $region37: #{tpu_custom_call.1} parent=1 // pred_fallthru
      _
    // Predicated region
    $region38: #{tpu_custom_call.1} parent=1 // pred_check
      _
    $region39: #{tpu_custom_call.1} parent=1 // pred_check_branch
      %1411 = sbr.rel (0) target = $region41
    $region40: #{tpu_custom_call.1} parent=1 // pred_region
      _
    $region41: #{tpu_custom_call.1} parent=1 // pred_fallthru
      _
    // Predicated region
    $region42: #{tpu_custom_call.1} parent=1 // pred_check
      _
    $region43: #{tpu_custom_call.1} parent=1 // pred_check_branch
      %1413 = sbr.rel (0) target = $region45
    $region44: #{tpu_custom_call.1} parent=1 // pred_region
      %1415 = dma.done [#allocation3], 16
    $region45: #{tpu_custom_call.1} parent=1 // pred_fallthru
      _
    %1416 = vsyncpa [#allocation3], 1

</llo_original>
